<compile_context>
chip_gen: v7x
topology: tpu7x:2x2x1
jax: 0.10.0
libtpu: 0.0.40
codegen_flags: <defaults>
</compile_context>

<pallas_src>
import numpy as np
import jax
import jax.numpy as jnp
from jax.experimental import pallas as pl
from jax.experimental.pallas import tpu as pltpu

# Synthetic, deterministic stand-in for BrainRegions().acronym
BRAIN_REGIONS = ["CA1", "CA3", "DG", "PO", "LP", "VISp", "MOs", "root"]
REGION_TO_INDX = {r: i for i, r in enumerate(BRAIN_REGIONS)}

LANES = 128           # TPU lane width
SUBLANES = 32         # int8 output packing granularity -> rows multiple of 32
MAX_TILE_ROWS = 2048  # 2048 x 128 int32 = 1 MiB per input buffer


def _encode_acronym(s: str) -> np.int32:
    # Deterministic base-128 pack of the first 4 ASCII chars -> positive int32.
    # Collision-free for distinct <=4-char prefixes (true for this vocab).
    code = 0
    for i, c in enumerate(s[:4]):
        code += (ord(c) & 0x7F) * (128 ** i)
    return np.int32(code)


# Static vocabulary codes baked into the kernel as Python constants.
VOCAB_CODES = tuple(int(_encode_acronym(r)) for r in BRAIN_REGIONS)
assert all(c >= 0 for c in VOCAB_CODES)          # -1 pad value must never match
assert len(set(VOCAB_CODES)) == len(VOCAB_CODES)  # collision-free encoding


def _make_lookup_kernel(vocab_codes):
    def lookup_kernel(codes_ref, out_ref):
        # codes_ref: (tile_rows, 128) int32 in VMEM; out_ref: same shape int8.
        codes = codes_ref[...]
        # Fold the -1 init into the first compare: exactly cmp+select per entry.
        idx = jnp.where(codes == jnp.int32(vocab_codes[0]),
                        jnp.int32(0), jnp.int32(-1))
        for v in range(1, len(vocab_codes)):
            idx = jnp.where(codes == jnp.int32(vocab_codes[v]),
                            jnp.int32(v), idx)
        out_ref[...] = idx.astype(jnp.int8)
    return lookup_kernel


def region_lookup(codes: np.ndarray) -> jnp.ndarray:
    """codes: (B, N) non-negative int32 per-neuron acronym codes -> (B, N) int32 indices."""
    B, N = codes.shape
    M = B * N
    codes = np.ascontiguousarray(codes, dtype=np.int32)
    # Pad value is -1; safe only because the encoding is non-negative.
    assert (codes >= 0).all(), "acronym codes must be non-negative"

    # (rows, 128) sublane/lane-dense layout; rows multiple of 32 (int8 tiling).
    rows = -(-M // LANES)
    rows = ((rows + SUBLANES - 1) // SUBLANES) * SUBLANES
    # Prefer >= 2 grid steps (v7x: both TensorCores get work) within tile cap.
    half = ((rows // 2 + SUBLANES - 1) // SUBLANES) * SUBLANES
    tile_rows = min(MAX_TILE_ROWS, max(SUBLANES, half))
    rows = -(-rows // tile_rows) * tile_rows
    m_pad = rows * LANES

    # Host-side pad + layout: single H2D transfer, no device-side pad pass.
    flat = np.full(m_pad, -1, dtype=np.int32)
    flat[:M] = codes.reshape(-1)
    codes_2d = jnp.asarray(flat.reshape(rows, LANES))

    grid = (rows // tile_rows,)
    cost = pl.CostEstimate(
        flops=2 * len(VOCAB_CODES) * m_pad,   # cmp + select per vocab entry
        transcendentals=0,
        bytes_accessed=m_pad * 4 + m_pad * 1,  # int32 read + int8 write
    )

    out = pl.pallas_call(
        _make_lookup_kernel(VOCAB_CODES),
        out_shape=jax.ShapeDtypeStruct((rows, LANES), jnp.int8),
        grid=grid,
        in_specs=[pl.BlockSpec((tile_rows, LANES), lambda i: (i, 0))],
        out_specs=pl.BlockSpec((tile_rows, LANES), lambda i: (i, 0)),
        compiler_params=pltpu.CompilerParams(dimension_semantics=("parallel",)),
        cost_estimate=cost,
    )(codes_2d)

    if m_pad == M:
        return out.reshape(B, N).astype(jnp.int32)
    return out.reshape(-1)[:M].reshape(B, N).astype(jnp.int32)


if __name__ == "__main__":
    # Deterministic small example: batch of 2 rows, 8 neurons per row.
    key = jax.random.PRNGKey(0)
    B, N = 2, 8
    choice = np.asarray(jax.random.randint(key, (B, N), 0, len(BRAIN_REGIONS)))
    neuron_regions = np.array(
        [[BRAIN_REGIONS[j] for j in row] for row in choice], dtype=object
    )

    # Host-side glue: string -> int32 code (deterministic, no checkpoint load).
    codes = np.array(
        [[_encode_acronym(r) for r in row] for row in neuron_regions], dtype=np.int32
    )

    region_indx = region_lookup(codes)
    region_indx = jax.block_until_ready(region_indx)

    expected = np.array(
        [[REGION_TO_INDX[r] for r in row] for row in neuron_regions], dtype=np.int32
    )
    assert region_indx.shape == (B, N)
    assert np.array_equal(np.asarray(region_indx), expected), (region_indx, expected)
    print("KERNEL_OK")
</pallas_src>

<mosaic_0001>
module attributes {stable_mosaic.version = 11 : i64} {
  func.func @lookup_kernel(%arg0: i32, %arg1: memref<32x128xi32, #tpu.memory_space<vmem>>, %arg2: memref<32x128xi8, #tpu.memory_space<vmem>>) attributes {dimension_semantics = [#tpu.dimension_semantics<parallel>], iteration_bounds = array<i64: 1>, scalar_prefetch = 0 : i64, scratch_operands = 0 : i64, tpu.core_type = #tpu.core_type<tc>, window_params = [{transform_indices = @transform_0, window_bounds = array<i64: 32, 128>}, {transform_indices = @transform_1, window_bounds = array<i64: 32, 128>}]} {
    %c0 = arith.constant 0 : index
    %c0_0 = arith.constant 0 : index
    %0 = vector.load %arg1[%c0, %c0_0] : memref<32x128xi32, #tpu.memory_space<vmem>>, vector<32x128xi32>
    %c811203_i32 = arith.constant 811203 : i32
    %1 = vector.broadcast %c811203_i32 : i32 to vector<32x128xi32>
    %2 = arith.cmpi eq, %0, %1 : vector<32x128xi32>
    %c0_i32 = arith.constant 0 : i32
    %c-1_i32 = arith.constant -1 : i32
    %3 = vector.broadcast %c0_i32 : i32 to vector<32x128xi32>
    %4 = vector.broadcast %c-1_i32 : i32 to vector<32x128xi32>
    %5 = arith.select %2, %3, %4 : vector<32x128xi1>, vector<32x128xi32>
    %c843971_i32 = arith.constant 843971 : i32
    %6 = vector.broadcast %c843971_i32 : i32 to vector<32x128xi32>
    %7 = arith.cmpi eq, %0, %6 : vector<32x128xi32>
    %c1_i32 = arith.constant 1 : i32
    %8 = vector.broadcast %c1_i32 : i32 to vector<32x128xi32>
    %9 = arith.select %7, %8, %5 : vector<32x128xi1>, vector<32x128xi32>
    %c9156_i32 = arith.constant 9156 : i32
    %10 = vector.broadcast %c9156_i32 : i32 to vector<32x128xi32>
    %11 = arith.cmpi eq, %0, %10 : vector<32x128xi32>
    %c2_i32 = arith.constant 2 : i32
    %12 = vector.broadcast %c2_i32 : i32 to vector<32x128xi32>
    %13 = arith.select %11, %12, %9 : vector<32x128xi1>, vector<32x128xi32>
    %c10192_i32 = arith.constant 10192 : i32
    %14 = vector.broadcast %c10192_i32 : i32 to vector<32x128xi32>
    %15 = arith.cmpi eq, %0, %14 : vector<32x128xi32>
    %c3_i32 = arith.constant 3 : i32
    %16 = vector.broadcast %c3_i32 : i32 to vector<32x128xi32>
    %17 = arith.select %15, %16, %13 : vector<32x128xi1>, vector<32x128xi32>
    %c10316_i32 = arith.constant 10316 : i32
    %18 = vector.broadcast %c10316_i32 : i32 to vector<32x128xi32>
    %19 = arith.cmpi eq, %0, %18 : vector<32x128xi32>
    %c4_i32 = arith.constant 4 : i32
    %20 = vector.broadcast %c4_i32 : i32 to vector<32x128xi32>
    %21 = arith.select %19, %20, %17 : vector<32x128xi1>, vector<32x128xi32>
    %c236250326_i32 = arith.constant 236250326 : i32
    %22 = vector.broadcast %c236250326_i32 : i32 to vector<32x128xi32>
    %23 = arith.cmpi eq, %0, %22 : vector<32x128xi32>
    %c5_i32 = arith.constant 5 : i32
    %24 = vector.broadcast %c5_i32 : i32 to vector<32x128xi32>
    %25 = arith.select %23, %24, %21 : vector<32x128xi1>, vector<32x128xi32>
    %c1894349_i32 = arith.constant 1894349 : i32
    %26 = vector.broadcast %c1894349_i32 : i32 to vector<32x128xi32>
    %27 = arith.cmpi eq, %0, %26 : vector<32x128xi32>
    %c6_i32 = arith.constant 6 : i32
    %28 = vector.broadcast %c6_i32 : i32 to vector<32x128xi32>
    %29 = arith.select %27, %28, %25 : vector<32x128xi1>, vector<32x128xi32>
    %c245102578_i32 = arith.constant 245102578 : i32
    %30 = vector.broadcast %c245102578_i32 : i32 to vector<32x128xi32>
    %31 = arith.cmpi eq, %0, %30 : vector<32x128xi32>
    %c7_i32 = arith.constant 7 : i32
    %32 = vector.broadcast %c7_i32 : i32 to vector<32x128xi32>
    %33 = arith.select %31, %32, %29 : vector<32x128xi1>, vector<32x128xi32>
    %34 = arith.trunci %33 : vector<32x128xi32> to vector<32x128xi8>
    %c0_1 = arith.constant 0 : index
    %c0_2 = arith.constant 0 : index
    %35 = vector.load %arg2[%c0_1, %c0_2] : memref<32x128xi8, #tpu.memory_space<vmem>>, vector<32x128xi8>
    tpu.vector_store %arg2[%c0_1, %c0_2], %34 {strides = array<i32>} : memref<32x128xi8, #tpu.memory_space<vmem>>, vector<32x128xi8>,
    return
  }
  func.func @transform_0(%arg0: i32) -> (i32, i32) {
    %c0_i32 = arith.constant 0 : i32
    %c0_i32_0 = arith.constant 0 : i32
    return %arg0, %c0_i32 : i32, i32
  }
  func.func @transform_1(%arg0: i32) -> (i32, i32) {
    %c0_i32 = arith.constant 0 : i32
    %c0_i32_0 = arith.constant 0 : i32
    return %arg0, %c0_i32 : i32, i32
  }
}

</mosaic_0001>

<llo_original>
// kernel: tpu_custom_call.1
$region0: #{tpu_custom_call.1}
  #allocation0 [shape = 'u32[]', space=smem, size = 0x4, offset = 0x4, fixed_abs, tag = 'smem constant byte address 0x4 - core index']
  #allocation1 [shape = 'u32[144,128]{1,0:T(1,128)}', space=vmem, size = 0x12000, scoped, tag = 'internal scratch']
  %s0 = inlined_call_operand.hbm [shape: s32[32,128], index: 0, kind: input, shape index: {}]
  %s1 = inlined_call_operand.hbm [shape: s8[32,128], index: 1, kind: output, shape index: {}]
  %s2 = sld [smem:[#allocation0]]
  $region18: #{tpu_custom_call.1} parent=0
    _
  %s4 = ssub.s32 1, %s2
  %s5 = scalar_select 0, %s4, %s2
  $region1: #{tpu_custom_call.1} parent=0
    #allocation2 [shape = 'u8[16384]{0}', space=vmem, size = 0x4000, scoped, tag = 'input window, operand 0, single buffered']
    #allocation3 [shape = 's32[1]{0}', space=sflag, size = 0x4, scoped, tag = 'scoped memory for tpu_custom_call.1']
    #allocation4 [shape = 's32[1]{0}', space=sflag, size = 0x4, scoped, tag = 'scoped memory for tpu_custom_call.1']
    #allocation5 [shape = 'u8[4096]{0}', space=vmem, size = 0x1000, scoped, tag = 'output window, operand 0, single buffered']
    %6 = vsyncpa [#allocation3], 0
    %7 = vsyncpa [#allocation4], 0
    // Predicated region
    $region2: #{tpu_custom_call.1} parent=1 // pred_check
      _
    $region3: #{tpu_custom_call.1} parent=1 // pred_check_branch
      %9 = sbr.rel (0) target = $region5
    $region4: #{tpu_custom_call.1} parent=1 // pred_region
      %s11 = ssub.s32 512, 512
      %12 = vsyncadd [#allocation3], %s11
      %s13 = sshll.u32 [#allocation2], 4
      %s14 = int_to_ptr.vmem [resolvable:$true] %s13
      %19 = dma.hbm_to_vmem [thread:$0]  %s0, 512, %s14, [#allocation3], 128, 128, 8
    $region5: #{tpu_custom_call.1} parent=1 // pred_fallthru
      _
    // Predicated region
    $region6: #{tpu_custom_call.1} parent=1 // pred_check
      _
    $region7: #{tpu_custom_call.1} parent=1 // pred_check_branch
      %21 = sbr.rel (0) target = $region9
    $region8: #{tpu_custom_call.1} parent=1 // pred_region
      %22 = dma.done [#allocation3], 512
    $region9: #{tpu_custom_call.1} parent=1 // pred_fallthru
      _
    %v23 = vld [vmem:[#allocation2] sm:$0xff]
    %v24 = vld [vmem:[#allocation2 + $0x8] sm:$0xff]
    %v25 = vld [vmem:[#allocation2 + $0x10] sm:$0xff]
    %v26 = vld [vmem:[#allocation2 + $0x18] sm:$0xff]
    %vm27 = vcmp.eq.s32.totalorder %v23, 811203
    %vm28 = vcmp.eq.s32.totalorder %v24, 811203
    %vm29 = vcmp.eq.s32.totalorder %v25, 811203
    %vm30 = vcmp.eq.s32.totalorder %v26, 811203
    %v31 = vsel %vm27, 0, 4294967295
    %v32 = vsel %vm28, 0, 4294967295
    %v33 = vsel %vm29, 0, 4294967295
    %v34 = vsel %vm30, 0, 4294967295
    %vm35 = vcmp.eq.s32.totalorder %v23, 843971
    %vm36 = vcmp.eq.s32.totalorder %v24, 843971
    %vm37 = vcmp.eq.s32.totalorder %v25, 843971
    %vm38 = vcmp.eq.s32.totalorder %v26, 843971
    %v39 = vsel %vm35, 1, %v31
    %v40 = vsel %vm36, 1, %v32
    %v41 = vsel %vm37, 1, %v33
    %v42 = vsel %vm38, 1, %v34
    %vm43 = vcmp.eq.s32.totalorder %v23, 9156
    %vm44 = vcmp.eq.s32.totalorder %v24, 9156
    %vm45 = vcmp.eq.s32.totalorder %v25, 9156
    %vm46 = vcmp.eq.s32.totalorder %v26, 9156
    %v47 = vsel %vm43, 2, %v39
    %v48 = vsel %vm44, 2, %v40
    %v49 = vsel %vm45, 2, %v41
    %v50 = vsel %vm46, 2, %v42
    %vm51 = vcmp.eq.s32.totalorder %v23, 10192
    %vm52 = vcmp.eq.s32.totalorder %v24, 10192
    %vm53 = vcmp.eq.s32.totalorder %v25, 10192
    %vm54 = vcmp.eq.s32.totalorder %v26, 10192
    %v55 = vsel %vm51, 3, %v47
    %v56 = vsel %vm52, 3, %v48
    %v57 = vsel %vm53, 3, %v49
    %v58 = vsel %vm54, 3, %v50
    %vm59 = vcmp.eq.s32.totalorder %v23, 10316
    %vm60 = vcmp.eq.s32.totalorder %v24, 10316
    %vm61 = vcmp.eq.s32.totalorder %v25, 10316
    %vm62 = vcmp.eq.s32.totalorder %v26, 10316
    %v63 = vsel %vm59, 4, %v55
    %v64 = vsel %vm60, 4, %v56
    %v65 = vsel %vm61, 4, %v57
    %v66 = vsel %vm62, 4, %v58
    %vm67 = vcmp.eq.s32.totalorder %v23, 236250326
    %vm68 = vcmp.eq.s32.totalorder %v24, 236250326
    %vm69 = vcmp.eq.s32.totalorder %v25, 236250326
    %vm70 = vcmp.eq.s32.totalorder %v26, 236250326
    %v71 = vsel %vm67, 5, %v63
    %v72 = vsel %vm68, 5, %v64
    %v73 = vsel %vm69, 5, %v65
    %v74 = vsel %vm70, 5, %v66
    %vm75 = vcmp.eq.s32.totalorder %v23, 1894349
    %vm76 = vcmp.eq.s32.totalorder %v24, 1894349
    %vm77 = vcmp.eq.s32.totalorder %v25, 1894349
    %vm78 = vcmp.eq.s32.totalorder %v26, 1894349
    %v79 = vsel %vm75, 6, %v71
    %v80 = vsel %vm76, 6, %v72
    %v81 = vsel %vm77, 6, %v73
    %v82 = vsel %vm78, 6, %v74
    %vm83 = vcmp.eq.s32.totalorder %v23, 245102578
    %vm84 = vcmp.eq.s32.totalorder %v24, 245102578
    %vm85 = vcmp.eq.s32.totalorder %v25, 245102578
    %vm86 = vcmp.eq.s32.totalorder %v26, 245102578
    %v87 = vsel %vm83, 7, %v79
    %v88 = vsel %vm84, 7, %v80
    %v89 = vsel %vm85, 7, %v81
    %v90 = vsel %vm86, 7, %v82
    %v91 = vpack.c.b16 %v88, %v87
    %v92 = vpack.c.b16 %v90, %v89
    %v93 = vpack.c.b8 %v92, %v91
    %94 = vst [vmem:[#allocation5] sm:$0xff] %v93
    // Predicated region
    $region10: #{tpu_custom_call.1} parent=1 // pred_check
      _
    $region11: #{tpu_custom_call.1} parent=1 // pred_check_branch
      %96 = sbr.rel (0) target = $region13
    $region12: #{tpu_custom_call.1} parent=1 // pred_region
      %s98 = ssub.s32 128, 128
      %99 = vsyncadd [#allocation4], %s98
      %s101 = sshll.u32 [#allocation5], 4
      %s102 = int_to_ptr.vmem [resolvable:$true] %s101
      %104 = dma.vmem_to_hbm [thread:$0]  %s102, 128, %s1, [#allocation4]
    $region13: #{tpu_custom_call.1} parent=1 // pred_fallthru
      _
    // Predicated region
    $region14: #{tpu_custom_call.1} parent=1 // pred_check
      _
    $region15: #{tpu_custom_call.1} parent=1 // pred_check_branch
      %106 = sbr.rel (0) target = $region17
    $region16: #{tpu_custom_call.1} parent=1 // pred_region
      %107 = dma.done [#allocation4], 128
    $region17: #{tpu_custom_call.1} parent=1 // pred_fallthru
      _
    %108 = vsyncpa [#allocation3], 1
    %109 = vsyncpa [#allocation4], 1

</llo_original>
